<compile_context>
chip_gen: v7x
topology: tpu7x:2x2x1
jax: 0.10.0
libtpu: 0.0.40
codegen_flags: <defaults>
</compile_context>

<pallas_src>
import functools
import math

import jax
import jax.numpy as jnp
from jax import lax
from jax.experimental import pallas as pl
from jax.experimental.pallas import tpu as pltpu


def _round_up(x, m):
    return ((x + m - 1) // m) * m


def _pick_tile(dim, cap, align):
    """Largest multiple of `align` <= min(cap, dim) that divides `dim` (dim % align == 0)."""
    t = max(align, min(cap, dim))
    t = (t // align) * align
    while dim % t:
        t -= align
    return t


def _vmem_capacity_bytes():
    try:
        cap = getattr(pltpu.get_tpu_info(), "vmem_capacity_bytes", None)
        if cap:
            return int(cap)
    except Exception:
        pass
    return 64 * 1024 * 1024  # conservative (v7x-sized) fallback


def prepare_flatten_head_params(weight, bias, param_dtype=None):
    """One-time weight/bias layout — call at parameter-load time, NOT per forward call.

    weight: [target_window, nf] (native nn.Linear layout), bias: [target_window].
    Returns (w_prepared [NF_pad, TW_pad], b_prepared [1, TW_pad]).
    """
    target_window, nf = weight.shape
    NF_pad = _round_up(nf, 128)
    TW_pad = _round_up(target_window, 128)
    w = weight if param_dtype is None else weight.astype(param_dtype)
    w_t = w.T  # [nf, target_window] -> NN contraction in the kernel (no in-kernel transpose)
    if (NF_pad, TW_pad) != (nf, target_window):
        w_t = jnp.pad(w_t, ((0, NF_pad - nf), (0, TW_pad - target_window)))
    b_p = jnp.pad(bias.astype(jnp.float32), (0, TW_pad - target_window)).reshape(1, TW_pad)
    return w_t, b_p


def _fullk_kernel(x_ref, w_ref, b_ref, o_ref):
    # Single full-K tile: no accumulator scratch, no init/finalize branches.
    acc = jnp.dot(x_ref[...], w_ref[...], preferred_element_type=jnp.float32)
    o_ref[...] = (acc + b_ref[...]).astype(o_ref.dtype)
    # TODO(synk): dropout with p > 0 would need pltpu.prng_* masking; p = 0 -> identity.


def _ktiled_kernel(x_ref, w_ref, b_ref, o_ref, acc_ref):
    k = pl.program_id(2)

    @pl.when(k == 0)
    def _():
        acc_ref[...] = jnp.zeros_like(acc_ref)

    acc_ref[...] += jnp.dot(x_ref[...], w_ref[...], preferred_element_type=jnp.float32)

    @pl.when(k == pl.num_programs(2) - 1)
    def _():
        o_ref[...] = (acc_ref[...] + b_ref[...]).astype(o_ref.dtype)


@functools.partial(jax.jit, static_argnames=("target_window",))
def flatten_head_forward(x, w_prepared, b_prepared, *, target_window):
    """x: [B, n_vars, d_model, patch_num]; w_prepared/b_prepared from prepare_flatten_head_params."""
    B, n_vars, d_model, patch_num = x.shape
    nf = d_model * patch_num
    NF_pad, TW_pad = w_prepared.shape
    assert NF_pad == _round_up(nf, 128) and b_prepared.shape == (1, TW_pad)

    M = B * n_vars
    x_flat = x.reshape(M, nf)  # nn.Flatten(start_dim=-2), leading dims merged

    # --- per-generation VMEM budget & tile caps --------------------------------
    vmem_cap = _vmem_capacity_bytes()
    vmem_limit = min(int(vmem_cap * 3 // 4), 96 * 1024 * 1024)   # ~48 MiB v7x, ~96 MiB v5e/v6e
    budget = int(vmem_limit * 0.8)
    tn_cap = 512 if vmem_cap >= 100 * 1024 * 1024 else 256

    # --- M tiling (M is tiny for FlattenHead: usually one VMEM-resident tile) ---
    if M <= 512:
        tm, M_pad = M, M
    else:
        tm = 512
        M_pad = _round_up(M, tm)

    # --- N tiling: lane-dense (multiple of 128), >=2 tiles when possible so the
    #     v7x megacore can split the weight stream across both TensorCores. ------
    cap_n = tn_cap
    if TW_pad >= 2 * 128:
        cap_n = min(cap_n, max(128, (TW_pad // 2 // 128) * 128))
    tn = _pick_tile(TW_pad, cap_n, 128)

    # Pad x only when actually required (nf is usually already a multiple of 128).
    if (M_pad, NF_pad) != (M, nf):
        x_flat = jnp.pad(x_flat, ((0, M_pad - M), (0, NF_pad - nf)))

    isz_x = jnp.dtype(x.dtype).itemsize
    isz_w = jnp.dtype(w_prepared.dtype).itemsize

    # --- K handling: collapse to a single full-K tile whenever it fits VMEM -----
    fullk_bytes = 2 * (tm * NF_pad * isz_x + NF_pad * tn * isz_w + tm * tn * isz_x + tn * 4)

    if fullk_bytes <= budget:
        grid = (TW_pad // tn, M_pad // tm)  # N outermost -> weight streamed exactly once
        out = pl.pallas_call(
            _fullk_kernel,
            out_shape=jax.ShapeDtypeStruct((M_pad, TW_pad), x.dtype),
            grid_spec=pltpu.PrefetchScalarGridSpec(
                num_scalar_prefetch=0,
                grid=grid,
                in_specs=[
                    pl.BlockSpec((tm, NF_pad), lambda j, i: (i, 0)),    # x (VMEM-resident)
                    pl.BlockSpec((NF_pad, tn), lambda j, i: (0, j)),    # weight stream
                    pl.BlockSpec((1, tn),      lambda j, i: (0, j)),    # bias
                ],
                out_specs=pl.BlockSpec((tm, tn), lambda j, i: (i, j)),
            ),
            compiler_params=pltpu.CompilerParams(
                dimension_semantics=("parallel", "parallel"),
                vmem_limit_bytes=vmem_limit,
            ),
        )(x_flat, w_prepared, b_prepared)
    else:
        # Very large nf: K-tiled accumulator fallback.
        cap_k = (budget // 2 - tm * tn * isz_x - tn * 4) // (tm * isz_x + tn * isz_w)
        tk = _pick_tile(NF_pad, max(128, cap_k), 128)
        grid = (TW_pad // tn, M_pad // tm, NF_pad // tk)
        out = pl.pallas_call(
            _ktiled_kernel,
            out_shape=jax.ShapeDtypeStruct((M_pad, TW_pad), x.dtype),
            grid_spec=pltpu.PrefetchScalarGridSpec(
                num_scalar_prefetch=0,
                grid=grid,
                in_specs=[
                    pl.BlockSpec((tm, tk), lambda j, i, k: (i, k)),
                    pl.BlockSpec((tk, tn), lambda j, i, k: (k, j)),
                    pl.BlockSpec((1, tn),  lambda j, i, k: (0, j)),
                ],
                out_specs=pl.BlockSpec((tm, tn), lambda j, i, k: (i, j)),
                scratch_shapes=[pltpu.VMEM((tm, tn), jnp.float32)],
            ),
            compiler_params=pltpu.CompilerParams(
                dimension_semantics=("parallel", "parallel", "arbitrary"),
                vmem_limit_bytes=vmem_limit,
            ),
        )(x_flat, w_prepared, b_prepared)

    return out[:M, :target_window].reshape(B, n_vars, target_window)


def flatten_head_reference(x, weight, bias):
    B, n_vars, d_model, patch_num = x.shape
    x_flat = x.reshape(B, n_vars, d_model * patch_num)
    return jnp.einsum("bvn,tn->bvt", x_flat, weight,
                      precision=lax.Precision.HIGHEST) + bias


if __name__ == "__main__":
    key = jax.random.PRNGKey(0)

    # Small shapes consistent with the module's forward.
    B, n_vars, d_model, patch_num = 2, 4, 16, 8
    nf = d_model * patch_num          # 128
    target_window = 96

    k_x, k_w, k_b = jax.random.split(key, 3)
    x = jax.random.normal(k_x, (B, n_vars, d_model, patch_num), dtype=jnp.float32)

    # Deterministic nn.Linear-style init: U(-1/sqrt(nf), 1/sqrt(nf))
    bound = 1.0 / math.sqrt(nf)
    weight = jax.random.uniform(k_w, (target_window, nf), minval=-bound, maxval=bound,
                                dtype=jnp.float32)
    bias = jax.random.uniform(k_b, (target_window,), minval=-bound, maxval=bound,
                              dtype=jnp.float32)

    # One-time parameter layout (outside the per-call path).
    w_prep, b_prep = prepare_flatten_head_params(weight, bias)

    y = flatten_head_forward(x, w_prep, b_prep, target_window=target_window)
    jax.block_until_ready(y)

    y_ref = flatten_head_reference(x, weight, bias)
    assert y.shape == (B, n_vars, target_window)
    assert jnp.allclose(y, y_ref, atol=1e-5, rtol=1e-5)

    print("KERNEL_OK")
</pallas_src>

<mosaic_0001>
module attributes {stable_mosaic.version = 11 : i64} {
  func.func @_fullk_kernel(%arg0: i32, %arg1: i32, %arg2: memref<8x128xf32, #tpu.memory_space<vmem>>, %arg3: memref<128x128xf32, #tpu.memory_space<vmem>>, %arg4: memref<1x128xf32, #tpu.memory_space<vmem>>, %arg5: memref<8x128xf32, #tpu.memory_space<vmem>>) attributes {dimension_semantics = [#tpu.dimension_semantics<parallel>, #tpu.dimension_semantics<parallel>], iteration_bounds = array<i64: 1, 1>, scalar_prefetch = 0 : i64, scratch_operands = 0 : i64, tpu.core_type = #tpu.core_type<tc>, window_params = [{transform_indices = @transform_0, window_bounds = array<i64: 8, 128>}, {transform_indices = @transform_1, window_bounds = array<i64: 128, 128>}, {transform_indices = @transform_2, window_bounds = array<i64: 1, 128>}, {transform_indices = @transform_3, window_bounds = array<i64: 8, 128>}]} {
    %c0 = arith.constant 0 : index
    %c0_0 = arith.constant 0 : index
    %0 = vector.load %arg2[%c0, %c0_0] : memref<8x128xf32, #tpu.memory_space<vmem>>, vector<8x128xf32>
    %c0_1 = arith.constant 0 : index
    %c0_2 = arith.constant 0 : index
    %1 = vector.load %arg3[%c0_1, %c0_2] : memref<128x128xf32, #tpu.memory_space<vmem>>, vector<128x128xf32>
    %cst = arith.constant dense<0.000000e+00> : vector<8x128xf32>
    %2 = tpu.matmul %0, %1, %cst {dimension_numbers = #tpu.dot_dimension_numbers<[1], [0], [0], [1], [0, 0, 1, 1], [], []>} : vector<8x128xf32>, vector<128x128xf32>, vector<8x128xf32> -> vector<8x128xf32>
    %c0_3 = arith.constant 0 : index
    %c0_4 = arith.constant 0 : index
    %3 = vector.load %arg4[%c0_3, %c0_4] : memref<1x128xf32, #tpu.memory_space<vmem>>, vector<1x128xf32>
    %4 = vector.broadcast %3 : vector<1x128xf32> to vector<8x128xf32>
    %5 = arith.addf %2, %4 : vector<8x128xf32>
    %c0_5 = arith.constant 0 : index
    %c0_6 = arith.constant 0 : index
    %6 = vector.load %arg5[%c0_5, %c0_6] : memref<8x128xf32, #tpu.memory_space<vmem>>, vector<8x128xf32>
    tpu.vector_store %arg5[%c0_5, %c0_6], %5 {strides = array<i32>} : memref<8x128xf32, #tpu.memory_space<vmem>>, vector<8x128xf32>,
    return
  }
  func.func @transform_0(%arg0: i32, %arg1: i32) -> (i32, i32) {
    %c0_i32 = arith.constant 0 : i32
    %c0_i32_0 = arith.constant 0 : i32
    return %arg1, %c0_i32 : i32, i32
  }
  func.func @transform_1(%arg0: i32, %arg1: i32) -> (i32, i32) {
    %c0_i32 = arith.constant 0 : i32
    %c0_i32_0 = arith.constant 0 : i32
    return %c0_i32, %arg0 : i32, i32
  }
  func.func @transform_2(%arg0: i32, %arg1: i32) -> (i32, i32) {
    %c0_i32 = arith.constant 0 : i32
    %c0_i32_0 = arith.constant 0 : i32
    return %c0_i32, %arg0 : i32, i32
  }
  func.func @transform_3(%arg0: i32, %arg1: i32) -> (i32, i32) {
    %c0_i32 = arith.constant 0 : i32
    return %arg1, %arg0 : i32, i32
  }
}

</mosaic_0001>

<llo_original>
// kernel: flatten_head_forward.1
$region0: #{flatten_head_forward.1}
  #allocation0 [shape = 'u32[]', space=smem, size = 0x4, offset = 0x4, fixed_abs, tag = 'smem constant byte address 0x4 - core index']
  #allocation1 [shape = 'u32[144,128]{1,0:T(1,128)}', space=vmem, size = 0x12000, scoped, tag = 'internal scratch']
  %s0 = inlined_call_operand.vmem [shape: f32[8,128], index: 0, kind: input, shape index: {}]
  %s1 = inlined_call_operand.vmem [shape: f32[128,128], index: 1, kind: input, shape index: {}]
  %s2 = inlined_call_operand.vmem [shape: f32[1,128], index: 2, kind: input, shape index: {}]
  %s3 = inlined_call_operand.hbm [shape: f32[8,128], index: 3, kind: output, shape index: {}]
  %s4 = sld [smem:[#allocation0]]
  $region22: #{flatten_head_forward.1} parent=0
    _
  %s6 = ssub.s32 1, %s4
  %s7 = scalar_select 0, %s6, %s4
  $region1: #{flatten_head_forward.1} parent=0
    #allocation2 [shape = 'u8[4096]{0}', space=vmem, size = 0x1000, scoped, tag = 'output window, operand 0, single buffered']
    #allocation3 [shape = 's32[1]{0}', space=sflag, size = 0x4, scoped, tag = 'scoped memory for flatten_head_forward.1']
    %8 = vsyncpa [#allocation3], 0
    // Predicated region
    $region2: #{flatten_head_forward.1} parent=1 // pred_check
      _
    $region3: #{flatten_head_forward.1} parent=1 // pred_check_branch
      %10 = sbr.rel (0) target = $region5
    $region4: #{flatten_head_forward.1} parent=1 // pred_region
      _
    $region5: #{flatten_head_forward.1} parent=1 // pred_fallthru
      _
    // Predicated region
    $region6: #{flatten_head_forward.1} parent=1 // pred_check
      _
    $region7: #{flatten_head_forward.1} parent=1 // pred_check_branch
      %12 = sbr.rel (0) target = $region9
    $region8: #{flatten_head_forward.1} parent=1 // pred_region
      _
    $region9: #{flatten_head_forward.1} parent=1 // pred_fallthru
      _
    // Predicated region
    $region10: #{flatten_head_forward.1} parent=1 // pred_check
      _
    $region11: #{flatten_head_forward.1} parent=1 // pred_check_branch
      %14 = sbr.rel (0) target = $region13
    $region12: #{flatten_head_forward.1} parent=1 // pred_region
      _
    $region13: #{flatten_head_forward.1} parent=1 // pred_fallthru
      _
    %v15 = vld [vmem:[%s0] sm:$0xff]
    %v16 = vld [vmem:[%s1] sm:$0xff]
    %v17 = vld [vmem:[%s1 + $0x8] sm:$0xff]
    %v18 = vld [vmem:[%s1 + $0x10] sm:$0xff]
    %v19 = vld [vmem:[%s1 + $0x18] sm:$0xff]
    %v20 = vld [vmem:[%s1 + $0x20] sm:$0xff]
    %v21 = vld [vmem:[%s1 + $0x28] sm:$0xff]
    %v22 = vld [vmem:[%s1 + $0x30] sm:$0xff]
    %v23 = vld [vmem:[%s1 + $0x38] sm:$0xff]
    %v24 = vld [vmem:[%s1 + $0x40] sm:$0xff]
    %v25 = vld [vmem:[%s1 + $0x48] sm:$0xff]
    %v26 = vld [vmem:[%s1 + $0x50] sm:$0xff]
    %v27 = vld [vmem:[%s1 + $0x58] sm:$0xff]
    %v28 = vld [vmem:[%s1 + $0x60] sm:$0xff]
    %v29 = vld [vmem:[%s1 + $0x68] sm:$0xff]
    %v30 = vld [vmem:[%s1 + $0x70] sm:$0xff]
    %v31 = vld [vmem:[%s1 + $0x78] sm:$0xff]
    %v32 = vld [vmem:[%s2] sm:$0x1]
    %v34 = vlaneseq
    %v35 = vshrl.u32 %v34, 7
    %v36 = vsub.s32 0, %v35
    %v37 = vrot.slane %v32, %v36
    %39 = vmatprep.subr.mxu0 0.0
    %40 = vmatpush1.msra.mxu0 %v16
    %41 = vmatprep.subr.mxu0 0.0
    %42 = vmatpush1.msra.mxu0 %v17
    %43 = vmatprep.subr.mxu0 0.0
    %44 = vmatpush1.msra.mxu0 %v18
    %45 = vmatprep.subr.mxu0 0.0
    %46 = vmatpush1.msra.mxu0 %v19
    %47 = vmatprep.subr.mxu0 0.0
    %48 = vmatpush1.msra.mxu0 %v20
    %49 = vmatprep.subr.mxu0 0.0
    %50 = vmatpush1.msra.mxu0 %v21
    %51 = vmatprep.subr.mxu0 0.0
    %52 = vmatpush1.msra.mxu0 %v22
    %53 = vmatprep.subr.mxu0 0.0
    %54 = vmatpush1.msra.mxu0 %v23
    %55 = vmatprep.subr.mxu0 0.0
    %56 = vmatpush1.msra.mxu0 %v24
    %57 = vmatprep.subr.mxu0 0.0
    %58 = vmatpush1.msra.mxu0 %v25
    %59 = vmatprep.subr.mxu0 0.0
    %60 = vmatpush1.msra.mxu0 %v26
    %61 = vmatprep.subr.mxu0 0.0
    %62 = vmatpush1.msra.mxu0 %v27
    %63 = vmatprep.subr.mxu0 0.0
    %64 = vmatpush1.msra.mxu0 %v28
    %65 = vmatprep.subr.mxu0 0.0
    %66 = vmatpush1.msra.mxu0 %v29
    %67 = vmatprep.subr.mxu0 0.0
    %68 = vmatpush1.msra.mxu0 %v30
    %69 = vmatprep.subr.mxu0 0.0
    %70 = vmatpush1.msra.mxu0 %v31
    %71 = vmatprep.subr.mxu0 0.0
    %72 = vmatpush1.msra.mxu0 0.0
    %73 = vmatprep.subr.mxu0 0.0
    %74 = vmatpush1.msra.mxu0 0.0
    %75 = vmatprep.subr.mxu0 0.0
    %76 = vmatpush1.msra.mxu0 0.0
    %77 = vmatprep.subr.mxu0 0.0
    %78 = vmatpush1.msra.mxu0 0.0
    %79 = vmatprep.subr.mxu0 0.0
    %80 = vmatpush1.msra.mxu0 0.0
    %81 = vmatprep.subr.mxu0 0.0
    %82 = vmatpush1.msra.mxu0 0.0
    %83 = vmatprep.subr.mxu0 0.0
    %84 = vmatpush1.msra.mxu0 0.0
    %85 = vmatprep.subr.mxu0 0.0
    %86 = vmatpush1.msra.mxu0 0.0
    %87 = vmatprep.subr.mxu0 0.0
    %88 = vmatpush1.msra.mxu0 0.0
    %89 = vmatprep.subr.mxu0 0.0
    %90 = vmatpush1.msra.mxu0 0.0
    %91 = vmatprep.subr.mxu0 0.0
    %92 = vmatpush1.msra.mxu0 0.0
    %93 = vmatprep.subr.mxu0 0.0
    %94 = vmatpush1.msra.mxu0 0.0
    %95 = vmatprep.subr.mxu0 0.0
    %96 = vmatpush1.msra.mxu0 0.0
    %97 = vmatprep.subr.mxu0 0.0
    %98 = vmatpush1.msra.mxu0 0.0
    %99 = vmatprep.subr.mxu0 0.0
    %100 = vmatpush1.msra.mxu0 0.0
    %101 = vmatprep.subr.mxu0 0.0
    %102 = vmatpush1.msra.mxu0 0.0
    %103 = vmatprep.mubr.f32.mxu0 0.0
    %104 = vmatmul.mubr.f32.gmra.mrb[0].mxu0 %v15
    %v105 = vpop.f32.mrb[0].mxu0
    %v106 = vadd.f32 %v37, %v105
    %v107 = vpop.f32.mrb[0].mxu0
    %108 = vdwg.mxu0
    %109 = vst [vmem:[#allocation2] sm:$0xff] %v106
    // Predicated region
    $region14: #{flatten_head_forward.1} parent=1 // pred_check
      _
    $region15: #{flatten_head_forward.1} parent=1 // pred_check_branch
      %111 = sbr.rel (0) target = $region17
    $region16: #{flatten_head_forward.1} parent=1 // pred_region
      %s113 = ssub.s32 128, 128
      %114 = vsyncadd [#allocation3], %s113
      %s116 = sshll.u32 [#allocation2], 4
      %s117 = int_to_ptr.vmem [resolvable:$true] %s116
      %119 = dma.vmem_to_hbm [thread:$0]  %s117, 128, %s3, [#allocation3]
    $region17: #{flatten_head_forward.1} parent=1 // pred_fallthru
      _
    // Predicated region
    $region18: #{flatten_head_forward.1} parent=1 // pred_check
      _
    $region19: #{flatten_head_forward.1} parent=1 // pred_check_branch
      %121 = sbr.rel (0) target = $region21
    $region20: #{flatten_head_forward.1} parent=1 // pred_region
      %122 = dma.done [#allocation3], 128
    $region21: #{flatten_head_forward.1} parent=1 // pred_fallthru
      _
    %123 = vsyncpa [#allocation3], 1

</llo_original>
